<compile_context>
chip_gen: v7x
topology: tpu7x:2x2x1
jax: 0.10.0
libtpu: 0.0.40
codegen_flags: <defaults>
</compile_context>

<pallas_src>
import math
import functools

import jax
import jax.numpy as jnp
from jax.experimental import pallas as pl
from jax.experimental.pallas import tpu as pltpu

D_MODEL = 32
P_DROPOUT = 0.1
MAX_LEN = 64


def make_positional_encoding(max_len: int, d_model: int) -> jnp.ndarray:
    """Same construction as the PyTorch __init__ (parameter/buffer setup glue)."""
    position = jnp.arange(max_len, dtype=jnp.float32)[:, None]            # (L, 1)
    div_term = jnp.exp(
        jnp.arange(0, d_model, 2, dtype=jnp.float32) * (-math.log(10000.0) / d_model)
    )                                                                     # (D/2,)
    angles = position * div_term                                          # (L, D/2)
    pe = jnp.zeros((max_len, d_model), dtype=jnp.float32)
    pe = pe.at[:, 0::2].set(jnp.sin(angles))
    pe = pe.at[:, 1::2].set(jnp.cos(angles))
    return pe


# ----------------------------- kernels --------------------------------------


def _add_pe_kernel(x_ref, pe_ref, o_ref):
    """Eval mode: y = x + pe (pe row broadcast over the sublane/batch axis)."""
    o_ref[...] = (x_ref[...] + pe_ref[...]).astype(o_ref.dtype)


def _add_pe_dropout_kernel(x_ref, pe_ref, bits_ref, o_ref, *, threshold, scale):
    """Training mode: y = (x + pe) * where(bits >= threshold, 1/(1-p), 0)."""
    y = x_ref[...] + pe_ref[...]                        # (Bt, SD) + (1, SD)
    keep = bits_ref[...] >= jnp.uint32(threshold)       # drop prob ~= threshold/2^32
    y = y * jnp.where(keep, jnp.float32(scale), jnp.float32(0.0))
    o_ref[...] = y.astype(o_ref.dtype)


# ----------------------------- wrapper ---------------------------------------


def _row_block(n_rows: int, row_elems: int, itemsize: int = 4,
               target_bytes: int = 2 << 20) -> int:
    """Pick a sublane-axis block: the full batch if small, else a multiple of 8
    sized ~target_bytes (keeps double-buffered tiles well inside scoped VMEM on
    v5e/v6e/v7x)."""
    rows = max(1, target_bytes // (row_elems * itemsize))
    if rows >= n_rows:
        return n_rows
    return max(8, (rows // 8) * 8)


def positional_encoding_forward(x, pe, *, seed: int = 0,
                                p_dropout: float = P_DROPOUT,
                                training: bool = True):
    """x: (B, S, D). Returns dropout(x + pe[:S, :]) with add+dropout in Pallas."""
    B, S, D = x.shape
    assert D == pe.shape[1]
    p = float(p_dropout)

    if training and p >= 1.0:          # dropout(p=1) zeroes everything
        return jnp.zeros_like(x)

    # Lane-dense slabs: last dim S*D (=256 here, a multiple of 128).
    SD = S * D
    x2 = x.reshape(B, SD)
    pe2 = pe[:S, :].reshape(1, SD)     # glue: pe[:x.size(1), :]

    Bt = _row_block(B, SD, jnp.dtype(x.dtype).itemsize)
    grid = (pl.cdiv(B, Bt),)

    x_spec = pl.BlockSpec((Bt, SD), lambda i: (i, 0))
    pe_spec = pl.BlockSpec((1, SD), lambda i: (0, 0))    # resident each step
    out_spec = pl.BlockSpec((Bt, SD), lambda i: (i, 0))

    compiler_params = pltpu.CompilerParams(
        dimension_semantics=("parallel",),   # independent blocks -> both v7x TCs
    )

    apply_dropout = training and p > 0.0
    if apply_dropout:
        key = jax.random.PRNGKey(seed)
        bits = jax.random.bits(key, (B, SD), dtype=jnp.uint32)
        threshold = min(int(round(p * (2.0 ** 32))), 2 ** 32 - 1)
        scale = 1.0 / (1.0 - p)
        kernel = functools.partial(_add_pe_dropout_kernel,
                                   threshold=threshold, scale=scale)
        bits_spec = pl.BlockSpec((Bt, SD), lambda i: (i, 0))
        out2 = pl.pallas_call(
            kernel,
            out_shape=jax.ShapeDtypeStruct((B, SD), x.dtype),
            grid=grid,
            in_specs=[x_spec, pe_spec, bits_spec],
            out_specs=out_spec,
            compiler_params=compiler_params,
        )(x2, pe2, bits)
    else:
        out2 = pl.pallas_call(
            _add_pe_kernel,
            out_shape=jax.ShapeDtypeStruct((B, SD), x.dtype),
            grid=grid,
            in_specs=[x_spec, pe_spec],
            out_specs=out_spec,
            compiler_params=compiler_params,
        )(x2, pe2)

    return out2.reshape(B, S, D)


if __name__ == "__main__":
    B, S = 2, 8
    key = jax.random.PRNGKey(0)
    x = jax.random.normal(key, (B, S, D_MODEL), dtype=jnp.float32)

    pe = make_positional_encoding(MAX_LEN, D_MODEL)

    # Training-mode forward (add + dropout mask/scale inside the Pallas kernel).
    y_train = positional_encoding_forward(x, pe, seed=0, training=True)
    jax.block_until_ready(y_train)
    assert y_train.shape == x.shape and y_train.dtype == x.dtype
    # Every surviving element must equal (x + pe) / (1 - p); dropped ones are 0.
    base = x + pe[:S, :][None, :, :]
    scaled = base / (1.0 - P_DROPOUT)
    ok = jnp.logical_or(jnp.isclose(y_train, scaled, atol=1e-5),
                        jnp.isclose(y_train, 0.0, atol=1e-6))
    assert bool(jnp.all(ok)), "training-mode values are not {scaled, 0}"

    # Eval-mode forward (dropout is identity) -- exact check vs plain JAX.
    y_eval = positional_encoding_forward(x, pe, seed=0, training=False)
    jax.block_until_ready(y_eval)
    assert jnp.allclose(y_eval, base, atol=1e-6), "eval-mode mismatch vs reference"

    print("KERNEL_OK")
</pallas_src>

<mosaic_0001>
module attributes {stable_mosaic.version = 11 : i64} {
  func.func @_add_pe_dropout_kernel(%arg0: i32, %arg1: memref<2x256xf32, #tpu.memory_space<vmem>>, %arg2: memref<1x256xf32, #tpu.memory_space<vmem>>, %arg3: memref<2x256xi32, #tpu.memory_space<vmem>>, %arg4: memref<2x256xf32, #tpu.memory_space<vmem>>) attributes {dimension_semantics = [#tpu.dimension_semantics<parallel>], iteration_bounds = array<i64: 1>, scalar_prefetch = 0 : i64, scratch_operands = 0 : i64, tpu.core_type = #tpu.core_type<tc>, window_params = [{transform_indices = @transform_0, window_bounds = array<i64: 2, 256>}, {pipeline_mode = #tpu.pipeline_mode<synchronous>, transform_indices = @transform_1, window_bounds = array<i64: 1, 256>}, {transform_indices = @transform_2, window_bounds = array<i64: 2, 256>}, {transform_indices = @transform_3, window_bounds = array<i64: 2, 256>}]} {
    %c0 = arith.constant 0 : index
    %c0_0 = arith.constant 0 : index
    %0 = vector.load %arg1[%c0, %c0_0] : memref<2x256xf32, #tpu.memory_space<vmem>>, vector<2x256xf32>
    %c0_1 = arith.constant 0 : index
    %c0_2 = arith.constant 0 : index
    %1 = vector.load %arg2[%c0_1, %c0_2] : memref<1x256xf32, #tpu.memory_space<vmem>>, vector<1x256xf32>
    %2 = vector.broadcast %1 : vector<1x256xf32> to vector<2x256xf32>
    %3 = arith.addf %0, %2 : vector<2x256xf32>
    %c0_3 = arith.constant 0 : index
    %c0_4 = arith.constant 0 : index
    %4 = vector.load %arg3[%c0_3, %c0_4] : memref<2x256xi32, #tpu.memory_space<vmem>>, vector<2x256xi32>
    %c429496730_i32 = arith.constant 429496730 : i32
    %5 = vector.broadcast %c429496730_i32 : i32 to vector<2x256xi32>
    %6 = arith.cmpi uge, %4, %5 : vector<2x256xi32>
    %cst = arith.constant 1.11111116 : f32
    %cst_5 = arith.constant 0.000000e+00 : f32
    %7 = vector.broadcast %cst : f32 to vector<2x256xf32>
    %8 = vector.broadcast %cst_5 : f32 to vector<2x256xf32>
    %9 = arith.select %6, %7, %8 : vector<2x256xi1>, vector<2x256xf32>
    %10 = arith.mulf %3, %9 : vector<2x256xf32>
    %c0_6 = arith.constant 0 : index
    %c0_7 = arith.constant 0 : index
    %11 = vector.load %arg4[%c0_6, %c0_7] : memref<2x256xf32, #tpu.memory_space<vmem>>, vector<2x256xf32>
    tpu.vector_store %arg4[%c0_6, %c0_7], %10 {strides = array<i32>} : memref<2x256xf32, #tpu.memory_space<vmem>>, vector<2x256xf32>,
    return
  }
  func.func @transform_0(%arg0: i32) -> (i32, i32) {
    %c0_i32 = arith.constant 0 : i32
    %c0_i32_0 = arith.constant 0 : i32
    return %arg0, %c0_i32 : i32, i32
  }
  func.func @transform_1(%arg0: i32) -> (i32, i32) {
    %c0_i32 = arith.constant 0 : i32
    %c0_i32_0 = arith.constant 0 : i32
    %c0_i32_1 = arith.constant 0 : i32
    return %c0_i32, %c0_i32_0 : i32, i32
  }
  func.func @transform_2(%arg0: i32) -> (i32, i32) {
    %c0_i32 = arith.constant 0 : i32
    %c0_i32_0 = arith.constant 0 : i32
    return %arg0, %c0_i32 : i32, i32
  }
  func.func @transform_3(%arg0: i32) -> (i32, i32) {
    %c0_i32 = arith.constant 0 : i32
    %c0_i32_0 = arith.constant 0 : i32
    return %arg0, %c0_i32 : i32, i32
  }
}

</mosaic_0001>

<llo_original>
// kernel: tpu_custom_call.1
$region0: #{tpu_custom_call.1}
  #allocation0 [shape = 'u32[]', space=smem, size = 0x4, offset = 0x4, fixed_abs, tag = 'smem constant byte address 0x4 - core index']
  #allocation1 [shape = 'u32[144,128]{1,0:T(1,128)}', space=vmem, size = 0x12000, scoped, tag = 'internal scratch']
  %s0 = inlined_call_operand.hbm [shape: f32[2,256], index: 0, kind: input, shape index: {}]
  %s1 = inlined_call_operand.vmem [shape: f32[1,256], index: 1, kind: input, shape index: {}]
  %s2 = inlined_call_operand.vmem [shape: u32[2,256], index: 2, kind: input, shape index: {}]
  %s3 = inlined_call_operand.hbm [shape: f32[2,256], index: 3, kind: output, shape index: {}]
  %s4 = sld [smem:[#allocation0]]
  $region26: #{tpu_custom_call.1} parent=0
    _
  %s6 = ssub.s32 1, %s4
  %s7 = scalar_select 0, %s6, %s4
  $region1: #{tpu_custom_call.1} parent=0
    #allocation2 [shape = 'u8[2048]{0}', space=vmem, size = 0x800, scoped, tag = 'input window, operand 0, single buffered']
    #allocation3 [shape = 's32[1]{0}', space=sflag, size = 0x4, scoped, tag = 'scoped memory for tpu_custom_call.1']
    #allocation4 [shape = 's32[1]{0}', space=sflag, size = 0x4, scoped, tag = 'scoped memory for tpu_custom_call.1']
    #allocation5 [shape = 'u8[2048]{0}', space=vmem, size = 0x800, scoped, tag = 'output window, operand 0, single buffered']
    %8 = vsyncpa [#allocation3], 0
    %9 = vsyncpa [#allocation4], 0
    // Predicated region
    $region2: #{tpu_custom_call.1} parent=1 // pred_check
      _
    $region3: #{tpu_custom_call.1} parent=1 // pred_check_branch
      %11 = sbr.rel (0) target = $region5
    $region4: #{tpu_custom_call.1} parent=1 // pred_region
      %s13 = ssub.s32 64, 64
      %14 = vsyncadd [#allocation3], %s13
      %s16 = sshll.u32 [#allocation2], 4
      %s17 = int_to_ptr.vmem [resolvable:$true] %s16
      %19 = dma.hbm_to_vmem [thread:$0]  %s0, 64, %s17, [#allocation3]
    $region5: #{tpu_custom_call.1} parent=1 // pred_fallthru
      _
    // Predicated region
    $region6: #{tpu_custom_call.1} parent=1 // pred_check
      _
    $region7: #{tpu_custom_call.1} parent=1 // pred_check_branch
      %21 = sbr.rel (0) target = $region9
    $region8: #{tpu_custom_call.1} parent=1 // pred_region
      _
    $region9: #{tpu_custom_call.1} parent=1 // pred_fallthru
      _
    // Predicated region
    $region10: #{tpu_custom_call.1} parent=1 // pred_check
      _
    $region11: #{tpu_custom_call.1} parent=1 // pred_check_branch
      %23 = sbr.rel (0) target = $region13
    $region12: #{tpu_custom_call.1} parent=1 // pred_region
      _
    $region13: #{tpu_custom_call.1} parent=1 // pred_fallthru
      _
    // Predicated region
    $region14: #{tpu_custom_call.1} parent=1 // pred_check
      _
    $region15: #{tpu_custom_call.1} parent=1 // pred_check_branch
      %25 = sbr.rel (0) target = $region17
    $region16: #{tpu_custom_call.1} parent=1 // pred_region
      %26 = dma.done [#allocation3], 64
    $region17: #{tpu_custom_call.1} parent=1 // pred_fallthru
      _
    %v27 = vld [vmem:[#allocation2] sm:$0xf]
    %v28 = vld [vmem:[%s1] sm:$0x3]
    %v30 = vlaneseq
    %v31 = vshrl.u32 %v30, 7
    %v32 = vsub.s32 0, %v31
    %v33 = vrot.slane %v28, %v32
    %v34 = vlaneseq
    %v35 = vshrl.u32 %v34, 7
    %v36 = vsub.s32 1, %v35
    %v37 = vrot.slane %v28, %v36
    %v38 = vcombine.low %v33, %v37
    %v40 = vunpack.c.l.s4 1983009808
    %v41 = vunpack.c.0.s8 %v40
    %v42 = vlaneseq
    %v43 = vshrl.u32 %v42, 7
    %v44 = vsub.s32 %v41, %v43
    %v45 = vrot.slane %v38, %v44
    %v47 = vadd.f32 %v27, %v45
    %v48 = vld [vmem:[%s2] sm:$0xf]
    %vm49 = vcmp.ge.u32.totalorder %v48, 429496730
    %v50 = vsel %vm49, 1.1111112, 0.0
    %v51 = vmul.f32 %v47, %v50
    %52 = vst [vmem:[#allocation5] sm:$0xf] %v51
    // Predicated region
    $region18: #{tpu_custom_call.1} parent=1 // pred_check
      _
    $region19: #{tpu_custom_call.1} parent=1 // pred_check_branch
      %54 = sbr.rel (0) target = $region21
    $region20: #{tpu_custom_call.1} parent=1 // pred_region
      %s56 = ssub.s32 64, 64
      %57 = vsyncadd [#allocation4], %s56
      %s59 = sshll.u32 [#allocation5], 4
      %s60 = int_to_ptr.vmem [resolvable:$true] %s59
      %62 = dma.vmem_to_hbm [thread:$0]  %s60, 64, %s3, [#allocation4]
    $region21: #{tpu_custom_call.1} parent=1 // pred_fallthru
      _
    // Predicated region
    $region22: #{tpu_custom_call.1} parent=1 // pred_check
      _
    $region23: #{tpu_custom_call.1} parent=1 // pred_check_branch
      %64 = sbr.rel (0) target = $region25
    $region24: #{tpu_custom_call.1} parent=1 // pred_region
      %65 = dma.done [#allocation4], 64
    $region25: #{tpu_custom_call.1} parent=1 // pred_fallthru
      _
    %66 = vsyncpa [#allocation3], 1
    %67 = vsyncpa [#allocation4], 1

</llo_original>
